<compile_context>
chip_gen: v7x
topology: tpu7x:2x2x1
jax: 0.10.0
libtpu: 0.0.40
codegen_flags: <defaults>
</compile_context>

<pallas_src>
import functools

import jax
import jax.numpy as jnp
from jax import lax
from jax.experimental import pallas as pl
from jax.experimental.pallas import tpu as pltpu


def _round_up(x, m):
    return ((x + m - 1) // m) * m


def _vmem_limit_bytes():
    # Generation-aware VMEM budget: above the 16/32 MiB scoped defaults, well
    # under physical capacity (v7x: 64 MiB -> 40 MiB; v5e/v6e: 128 MiB -> 80 MiB).
    try:
        cap = int(getattr(pltpu.get_tpu_info(), "vmem_capacity_bytes", 0) or 0)
    except Exception:
        cap = 0
    if cap <= 0:
        return 40 * 1024 * 1024          # safe on every generation
    return min(cap * 5 // 8, 96 * 1024 * 1024)


def _contrastive_loss_kernel(
    f_row_ref,      # (TM, D)  bf16 : normalised, sqrt(1/T)-scaled row tile
    f_colT_ref,     # (D, TN)  bf16 : same features, pre-transposed in wrapper
    t_row_ref,      # (TM, 1)  int32
    t_col_ref,      # (1, TN)  int32
    cnt_ref,        # (TM, 1)  f32  : precomputed positive counts (self excluded)
    loss_ref,       # (TM, 1)  f32  : out, per-row loss (0 where no positives)
    pos_sum_ref,    # (TM, 1)  f32  scratch
    denom_ref,      # (TM, 1)  f32  scratch
    *, n_zero_pad,
):
    qi = pl.program_id(0)            # row-tile index ("parallel")
    ki = pl.program_id(1)            # col-tile index (reduction, "arbitrary")
    n_k = pl.num_programs(1)

    @pl.when(ki == 0)
    def _init():
        pos_sum_ref[...] = jnp.zeros_like(pos_sum_ref)
        denom_ref[...] = jnp.zeros_like(denom_ref)

    # bf16 x bf16 MXU matmul with f32 accumulation.  1/T is already folded
    # (sqrt on each side); column operand is pre-transposed, so this is a
    # standard (M,K)x(K,N) contraction -- no per-step XLU transpose.
    sim = jnp.dot(f_row_ref[...], f_colT_ref[...],
                  preferred_element_type=jnp.float32)            # (TM, TN) f32

    same = t_row_ref[...] == t_col_ref[...]                      # (TM, TN) bool
    e = jnp.exp(sim)                                             # EUP

    @pl.when(qi != ki)
    def _off_diag_block():                                       # no masking needed
        pos_sum_ref[...] += jnp.sum(jnp.where(same, sim, 0.0),
                                    axis=1, keepdims=True)
        denom_ref[...] += jnp.sum(e, axis=1, keepdims=True)

    @pl.when(qi == ki)    # TM == TN and square grid => global diagonal lives here
    def _diag_block():
        tm, tn = sim.shape
        r = lax.broadcasted_iota(jnp.int32, (tm, tn), 0)
        c = lax.broadcasted_iota(jnp.int32, (tm, tn), 1)
        off = r != c
        # Exclude the diagonal BEFORE the exp-sum (exp(1/T) ~ 1.6e6 would swamp
        # the off-diagonal sum if subtracted afterwards).
        pos_sum_ref[...] += jnp.sum(
            jnp.where(jnp.logical_and(same, off), sim, 0.0),
            axis=1, keepdims=True)
        denom_ref[...] += jnp.sum(jnp.where(off, e, 0.0),
                                  axis=1, keepdims=True)

    @pl.when(ki == n_k - 1)
    def _finalize():
        cnt = cnt_ref[...]
        valid = cnt > 0.5
        pos_logits = pos_sum_ref[...] / jnp.maximum(cnt, 1.0)
        denom = denom_ref[...]
        if n_zero_pad:   # static: each zero-padded column contributed exp(0)=1
            denom = denom - float(n_zero_pad)
        # -log(exp(pos)/denom + 1e-10) restructured so the per-row division
        # becomes a log on the otherwise-idle EUP.
        loss_i = -jnp.log(jnp.exp(pos_logits - jnp.log(denom)) + 1e-10)
        loss_ref[...] = jnp.where(valid, loss_i, 0.0)


def contrastive_loss(features, element_types, temperature=0.07, tile=512):
    """Pallas TPU version of ContrastiveLoss.forward (features: [N, D])."""
    n, d = features.shape
    if n <= 1:
        return jnp.float32(0.0)

    types = jnp.asarray(element_types, dtype=jnp.int32).reshape(n)

    # ---- one-time wrapper preprocessing (cheap XLA work vs. the O(N^2 D) kernel) ----
    f32 = features.astype(jnp.float32)
    ss = jnp.sum(f32 * f32, axis=1, keepdims=True)
    fn = f32 * lax.rsqrt(jnp.maximum(ss, 1e-24))          # F.normalize(dim=1)
    scale = float(1.0 / temperature) ** 0.5               # sqrt(1/T) on BOTH sides
    f_scaled = (fn * scale).astype(jnp.bfloat16)          # bf16 MXU operands

    # Positive count per row (self excluded).  O(N^2) int compare in the
    # wrapper; trivial next to the kernel's matmul work.
    cnt = (jnp.sum((types[:, None] == types[None, :]).astype(jnp.float32),
                   axis=1) - 1.0)

    # ---- tile selection: TM == TN, square grid so the diagonal => qi == ki ----
    if n <= tile:
        tile = _round_up(n, 8)       # single-tile regime (one core handles it)
    else:
        tile = _round_up(tile, 128)  # lane-aligned so the (1, tile) type row tiles
    n_pad_total = _round_up(n, tile)
    pad = n_pad_total - n

    if pad:
        f_scaled = jnp.concatenate(
            [f_scaled, jnp.zeros((pad, d), f_scaled.dtype)], axis=0)
        # Unique sentinel types: padded rows/cols never match a real type.
        sentinels = jnp.max(types) + 1 + jnp.arange(pad, dtype=jnp.int32)
        types = jnp.concatenate([types, sentinels], axis=0)
        cnt = jnp.concatenate([cnt, jnp.zeros((pad,), jnp.float32)], axis=0)

    f_row = f_scaled                 # (Np, D) bf16
    f_colT = f_scaled.T              # (D, Np) bf16: one-time transpose -> MXU sees (M,K)x(K,N)
    t_row = types.reshape(n_pad_total, 1)
    t_col = types.reshape(1, n_pad_total)
    cnt_col = cnt.reshape(n_pad_total, 1)
    g = n_pad_total // tile

    kernel = functools.partial(_contrastive_loss_kernel, n_zero_pad=int(pad))

    loss_rows = pl.pallas_call(
        kernel,
        out_shape=jax.ShapeDtypeStruct((n_pad_total, 1), jnp.float32),
        grid_spec=pltpu.PrefetchScalarGridSpec(
            num_scalar_prefetch=0,
            grid=(g, g),
            in_specs=[
                pl.BlockSpec((tile, d), lambda qi, ki: (qi, 0)),   # row features
                pl.BlockSpec((d, tile), lambda qi, ki: (0, ki)),   # col features (pre-T)
                pl.BlockSpec((tile, 1), lambda qi, ki: (qi, 0)),   # row types
                pl.BlockSpec((1, tile), lambda qi, ki: (0, ki)),   # col types
                pl.BlockSpec((tile, 1), lambda qi, ki: (qi, 0)),   # precomputed pos_cnt
            ],
            out_specs=pl.BlockSpec((tile, 1), lambda qi, ki: (qi, 0)),
            scratch_shapes=[
                pltpu.VMEM((tile, 1), jnp.float32),   # pos_sum
                pltpu.VMEM((tile, 1), jnp.float32),   # denom
            ],
        ),
        compiler_params=pltpu.CompilerParams(
            dimension_semantics=("parallel", "arbitrary"),
            vmem_limit_bytes=_vmem_limit_bytes(),
        ),
    )(f_row, f_colT, t_row, t_col, cnt_col)

    # O(N) epilogue in plain JAX (keeps the row-tile grid axis fully parallel).
    valid_count = jnp.sum((cnt > 0.0).astype(jnp.float32))
    total = jnp.sum(loss_rows)
    return jnp.where(valid_count > 0.0, total / jnp.maximum(valid_count, 1.0), 0.0)


def contrastive_loss_ref(features, element_types, temperature=0.07):
    """Pure-JAX (full f32) reference mirroring the PyTorch module."""
    f = features.astype(jnp.float32)
    norm = jnp.sqrt(jnp.sum(f * f, axis=1, keepdims=True))
    f = f / jnp.maximum(norm, 1e-12)
    sim = jnp.matmul(f, f.T, precision=lax.Precision.HIGHEST) / temperature
    t = jnp.asarray(element_types)
    n = f.shape[0]
    eye = jnp.eye(n, dtype=bool)
    pos_mask = (t[:, None] == t[None, :]) & (~eye)
    pos_cnt = jnp.sum(pos_mask.astype(jnp.float32), axis=1)
    pos_sum = jnp.sum(jnp.where(pos_mask, sim, 0.0), axis=1)
    valid = pos_cnt > 0
    pos_logits = pos_sum / jnp.maximum(pos_cnt, 1.0)
    denom = jnp.sum(jnp.where(eye, 0.0, jnp.exp(sim)), axis=1)
    loss_i = -jnp.log(jnp.exp(pos_logits) / denom + 1e-10)
    loss_i = jnp.where(valid, loss_i, 0.0)
    vc = jnp.sum(valid.astype(jnp.float32))
    return jnp.where(vc > 0, jnp.sum(loss_i) / vc, 0.0)


if __name__ == "__main__":
    key = jax.random.PRNGKey(0)

    # bf16 MXU operands => consciously loosened tolerance vs. the f32 reference.
    def _check(name, features, types, temperature=0.07, tile=512, tol=3e-2):
        got = jax.block_until_ready(
            contrastive_loss(features, types, temperature=temperature, tile=tile))
        want = contrastive_loss_ref(features, types, temperature=temperature)
        assert jnp.allclose(got, want, atol=tol, rtol=tol), (name, got, want)

    k1, k2, k3, k4 = jax.random.split(key, 4)

    # 1) small, single tile (N=8, D=32); type 3 appears once -> that row has
    #    no positives and is skipped via the valid_count path.
    f1 = jax.random.normal(k1, (8, 32), dtype=jnp.float32)
    t1 = jnp.array([0, 1, 0, 2, 1, 0, 2, 3], dtype=jnp.int32)
    _check("small", f1, t1)

    # 2) N not a multiple of the sublane tile -> zero-pad + sentinel types +
    #    denominator correction on the single-tile path.
    f2 = jax.random.normal(k2, (10, 32), dtype=jnp.float32)
    t2 = jnp.array([0, 1, 0, 2, 1, 0, 2, 3, 1, 2], dtype=jnp.int32)
    _check("padded", f2, t2)

    # 3) multi-tile square grid (3x3 tiles of 128), bf16 input features:
    #    off-diagonal blocks take the unmasked fast path.
    f3 = jax.random.normal(k3, (384, 64), dtype=jnp.float32).astype(jnp.bfloat16)
    t3 = jax.random.randint(jax.random.PRNGKey(7), (384,), 0, 6, dtype=jnp.int32)
    _check("tiled_bf16", f3, t3, tile=128)

    # 4) multi-tile grid WITH padding (N=300 -> pad to 384, 3x3 tiles of 128):
    #    exercises the sentinel/diag/denominator-correction interplay.
    f4 = jax.random.normal(k4, (300, 64), dtype=jnp.float32)
    t4 = jax.random.randint(jax.random.PRNGKey(11), (300,), 0, 5, dtype=jnp.int32)
    _check("tiled_padded", f4, t4, tile=128)

    print("KERNEL_OK")
</pallas_src>

<mosaic_0001>
module attributes {stable_mosaic.version = 11 : i64} {
  func.func @_contrastive_loss_kernel(%arg0: i32, %arg1: i32, %arg2: memref<8x32xbf16, #tpu.memory_space<vmem>>, %arg3: memref<32x8xbf16, #tpu.memory_space<vmem>>, %arg4: memref<8x1xi32, #tpu.memory_space<vmem>>, %arg5: memref<1x8xi32, #tpu.memory_space<vmem>>, %arg6: memref<8x1xf32, #tpu.memory_space<vmem>>, %arg7: memref<8x1xf32, #tpu.memory_space<vmem>>, %arg8: memref<8x1xf32, #tpu.memory_space<vmem>>, %arg9: memref<8x1xf32, #tpu.memory_space<vmem>>) attributes {dimension_semantics = [#tpu.dimension_semantics<parallel>, #tpu.dimension_semantics<arbitrary>], iteration_bounds = array<i64: 1, 1>, scalar_prefetch = 0 : i64, scratch_operands = 2 : i64, tpu.core_type = #tpu.core_type<tc>, window_params = [{transform_indices = @transform_0, window_bounds = array<i64: 8, 32>}, {transform_indices = @transform_1, window_bounds = array<i64: 32, 8>}, {transform_indices = @transform_2, window_bounds = array<i64: 8, 1>}, {transform_indices = @transform_3, window_bounds = array<i64: 1, 8>}, {transform_indices = @transform_4, window_bounds = array<i64: 8, 1>}, {transform_indices = @transform_5, window_bounds = array<i64: 8, 1>}]} {
    %c0_i32 = arith.constant 0 : i32
    %0 = arith.cmpi eq, %arg1, %c0_i32 : i32
    %1 = arith.extui %0 : i1 to i32
    %c0_i32_0 = arith.constant 0 : i32
    %2 = arith.cmpi ne, %1, %c0_i32_0 : i32
    scf.if %2 {
      %cst_12 = arith.constant 0.000000e+00 : f32
      %21 = vector.broadcast %cst_12 : f32 to vector<8x1xf32>
      %c0_13 = arith.constant 0 : index
      %c0_14 = arith.constant 0 : index
      %22 = vector.load %arg8[%c0_13, %c0_14] : memref<8x1xf32, #tpu.memory_space<vmem>>, vector<8x1xf32>
      tpu.vector_store %arg8[%c0_13, %c0_14], %21 {strides = array<i32>} : memref<8x1xf32, #tpu.memory_space<vmem>>, vector<8x1xf32>,
      %cst_15 = arith.constant 0.000000e+00 : f32
      %23 = vector.broadcast %cst_15 : f32 to vector<8x1xf32>
      %c0_16 = arith.constant 0 : index
      %c0_17 = arith.constant 0 : index
      %24 = vector.load %arg9[%c0_16, %c0_17] : memref<8x1xf32, #tpu.memory_space<vmem>>, vector<8x1xf32>
      tpu.vector_store %arg9[%c0_16, %c0_17], %23 {strides = array<i32>} : memref<8x1xf32, #tpu.memory_space<vmem>>, vector<8x1xf32>,
    } else {
    }
    %c0 = arith.constant 0 : index
    %c0_1 = arith.constant 0 : index
    %3 = vector.load %arg2[%c0, %c0_1] : memref<8x32xbf16, #tpu.memory_space<vmem>>, vector<8x32xbf16>
    %c0_2 = arith.constant 0 : index
    %c0_3 = arith.constant 0 : index
    %4 = vector.load %arg3[%c0_2, %c0_3] : memref<32x8xbf16, #tpu.memory_space<vmem>>, vector<32x8xbf16>
    %cst = arith.constant dense<0.000000e+00> : vector<8x8xf32>
    %5 = tpu.matmul %3, %4, %cst {dimension_numbers = #tpu.dot_dimension_numbers<[1], [0], [0], [1], [0, 0, 1, 1], [], []>} : vector<8x32xbf16>, vector<32x8xbf16>, vector<8x8xf32> -> vector<8x8xf32>
    %c0_4 = arith.constant 0 : index
    %c0_5 = arith.constant 0 : index
    %6 = vector.load %arg4[%c0_4, %c0_5] : memref<8x1xi32, #tpu.memory_space<vmem>>, vector<8x1xi32>
    %c0_6 = arith.constant 0 : index
    %c0_7 = arith.constant 0 : index
    %7 = vector.load %arg5[%c0_6, %c0_7] : memref<1x8xi32, #tpu.memory_space<vmem>>, vector<1x8xi32>
    %8 = vector.broadcast %6 : vector<8x1xi32> to vector<8x8xi32>
    %9 = vector.broadcast %7 : vector<1x8xi32> to vector<8x8xi32>
    %10 = arith.cmpi eq, %8, %9 : vector<8x8xi32>
    %11 = math.exp %5 : vector<8x8xf32>
    %12 = arith.cmpi ne, %arg0, %arg1 : i32
    %13 = arith.extui %12 : i1 to i32
    %c0_i32_8 = arith.constant 0 : i32
    %14 = arith.cmpi ne, %13, %c0_i32_8 : i32
    scf.if %14 {
      %c0_12 = arith.constant 0 : index
      %c0_13 = arith.constant 0 : index
      %21 = vector.load %arg8[%c0_12, %c0_13] : memref<8x1xf32, #tpu.memory_space<vmem>>, vector<8x1xf32>
      %cst_14 = arith.constant 0.000000e+00 : f32
      %22 = vector.broadcast %cst_14 : f32 to vector<8x8xf32>
      %23 = arith.select %10, %5, %22 : vector<8x8xi1>, vector<8x8xf32>
      %cst_15 = arith.constant dense<0.000000e+00> : vector<8xf32>
      %24 = vector.multi_reduction <add>, %23, %cst_15 [1] : vector<8x8xf32> to vector<8xf32>
      %25 = vector.shape_cast %24 : vector<8xf32> to vector<8x1xf32>
      %26 = arith.addf %21, %25 : vector<8x1xf32>
      %c0_16 = arith.constant 0 : index
      %c0_17 = arith.constant 0 : index
      %27 = vector.load %arg8[%c0_16, %c0_17] : memref<8x1xf32, #tpu.memory_space<vmem>>, vector<8x1xf32>
      tpu.vector_store %arg8[%c0_16, %c0_17], %26 {strides = array<i32>} : memref<8x1xf32, #tpu.memory_space<vmem>>, vector<8x1xf32>,
      %c0_18 = arith.constant 0 : index
      %c0_19 = arith.constant 0 : index
      %28 = vector.load %arg9[%c0_18, %c0_19] : memref<8x1xf32, #tpu.memory_space<vmem>>, vector<8x1xf32>
      %cst_20 = arith.constant dense<0.000000e+00> : vector<8xf32>
      %29 = vector.multi_reduction <add>, %11, %cst_20 [1] : vector<8x8xf32> to vector<8xf32>
      %30 = vector.shape_cast %29 : vector<8xf32> to vector<8x1xf32>
      %31 = arith.addf %28, %30 : vector<8x1xf32>
      %c0_21 = arith.constant 0 : index
      %c0_22 = arith.constant 0 : index
      %32 = vector.load %arg9[%c0_21, %c0_22] : memref<8x1xf32, #tpu.memory_space<vmem>>, vector<8x1xf32>
      tpu.vector_store %arg9[%c0_21, %c0_22], %31 {strides = array<i32>} : memref<8x1xf32, #tpu.memory_space<vmem>>, vector<8x1xf32>,
    } else {
    }
    %15 = arith.cmpi eq, %arg0, %arg1 : i32
    %16 = arith.extui %15 : i1 to i32
    %c0_i32_9 = arith.constant 0 : i32
    %17 = arith.cmpi ne, %16, %c0_i32_9 : i32
    scf.if %17 {
      %21 = tpu.iota {dimensions = array<i32: 0>} : vector<8x8xi32>
      %22 = tpu.iota {dimensions = array<i32: 1>} : vector<8x8xi32>
      %23 = arith.cmpi ne, %21, %22 : vector<8x8xi32>
      %c0_12 = arith.constant 0 : index
      %c0_13 = arith.constant 0 : index
      %24 = vector.load %arg8[%c0_12, %c0_13] : memref<8x1xf32, #tpu.memory_space<vmem>>, vector<8x1xf32>
      %25 = arith.andi %10, %23 : vector<8x8xi1>
      %cst_14 = arith.constant 0.000000e+00 : f32
      %26 = vector.broadcast %cst_14 : f32 to vector<8x8xf32>
      %27 = arith.select %25, %5, %26 : vector<8x8xi1>, vector<8x8xf32>
      %cst_15 = arith.constant dense<0.000000e+00> : vector<8xf32>
      %28 = vector.multi_reduction <add>, %27, %cst_15 [1] : vector<8x8xf32> to vector<8xf32>
      %29 = vector.shape_cast %28 : vector<8xf32> to vector<8x1xf32>
      %30 = arith.addf %24, %29 : vector<8x1xf32>
      %c0_16 = arith.constant 0 : index
      %c0_17 = arith.constant 0 : index
      %31 = vector.load %arg8[%c0_16, %c0_17] : memref<8x1xf32, #tpu.memory_space<vmem>>, vector<8x1xf32>
      tpu.vector_store %arg8[%c0_16, %c0_17], %30 {strides = array<i32>} : memref<8x1xf32, #tpu.memory_space<vmem>>, vector<8x1xf32>,
      %c0_18 = arith.constant 0 : index
      %c0_19 = arith.constant 0 : index
      %32 = vector.load %arg9[%c0_18, %c0_19] : memref<8x1xf32, #tpu.memory_space<vmem>>, vector<8x1xf32>
      %cst_20 = arith.constant 0.000000e+00 : f32
      %33 = vector.broadcast %cst_20 : f32 to vector<8x8xf32>
      %34 = arith.select %23, %11, %33 : vector<8x8xi1>, vector<8x8xf32>
      %cst_21 = arith.constant dense<0.000000e+00> : vector<8xf32>
      %35 = vector.multi_reduction <add>, %34, %cst_21 [1] : vector<8x8xf32> to vector<8xf32>
      %36 = vector.shape_cast %35 : vector<8xf32> to vector<8x1xf32>
      %37 = arith.addf %32, %36 : vector<8x1xf32>
      %c0_22 = arith.constant 0 : index
      %c0_23 = arith.constant 0 : index
      %38 = vector.load %arg9[%c0_22, %c0_23] : memref<8x1xf32, #tpu.memory_space<vmem>>, vector<8x1xf32>
      tpu.vector_store %arg9[%c0_22, %c0_23], %37 {strides = array<i32>} : memref<8x1xf32, #tpu.memory_space<vmem>>, vector<8x1xf32>,
    } else {
    }
    %c0_i32_10 = arith.constant 0 : i32
    %18 = arith.cmpi eq, %arg1, %c0_i32_10 : i32
    %19 = arith.extui %18 : i1 to i32
    %c0_i32_11 = arith.constant 0 : i32
    %20 = arith.cmpi ne, %19, %c0_i32_11 : i32
    scf.if %20 {
      %c0_12 = arith.constant 0 : index
      %c0_13 = arith.constant 0 : index
      %21 = vector.load %arg6[%c0_12, %c0_13] : memref<8x1xf32, #tpu.memory_space<vmem>>, vector<8x1xf32>
      %cst_14 = arith.constant 5.000000e-01 : f32
      %22 = vector.broadcast %cst_14 : f32 to vector<8x1xf32>
      %23 = arith.cmpf ogt, %21, %22 : vector<8x1xf32>
      %c0_15 = arith.constant 0 : index
      %c0_16 = arith.constant 0 : index
      %24 = vector.load %arg8[%c0_15, %c0_16] : memref<8x1xf32, #tpu.memory_space<vmem>>, vector<8x1xf32>
      %cst_17 = arith.constant 1.000000e+00 : f32
      %25 = vector.broadcast %cst_17 : f32 to vector<8x1xf32>
      %26 = arith.maximumf %21, %25 : vector<8x1xf32>
      %27 = arith.divf %24, %26 : vector<8x1xf32>
      %c0_18 = arith.constant 0 : index
      %c0_19 = arith.constant 0 : index
      %28 = vector.load %arg9[%c0_18, %c0_19] : memref<8x1xf32, #tpu.memory_space<vmem>>, vector<8x1xf32>
      %29 = math.log %28 : vector<8x1xf32>
      %30 = arith.subf %27, %29 : vector<8x1xf32>
      %31 = math.exp %30 : vector<8x1xf32>
      %cst_20 = arith.constant 1.000000e-10 : f32
      %32 = vector.broadcast %cst_20 : f32 to vector<8x1xf32>
      %33 = arith.addf %31, %32 : vector<8x1xf32>
      %34 = math.log %33 : vector<8x1xf32>
      %cst_21 = arith.constant 0.000000e+00 : f32
      %35 = vector.broadcast %cst_21 : f32 to vector<8x1xf32>
      %36 = arith.subf %35, %34 : vector<8x1xf32>
      %cst_22 = arith.constant 0.000000e+00 : f32
      %37 = vector.broadcast %cst_22 : f32 to vector<8x1xf32>
      %38 = arith.select %23, %36, %37 : vector<8x1xi1>, vector<8x1xf32>
      %c0_23 = arith.constant 0 : index
      %c0_24 = arith.constant 0 : index
      %39 = vector.load %arg7[%c0_23, %c0_24] : memref<8x1xf32, #tpu.memory_space<vmem>>, vector<8x1xf32>
      tpu.vector_store %arg7[%c0_23, %c0_24], %38 {strides = array<i32>} : memref<8x1xf32, #tpu.memory_space<vmem>>, vector<8x1xf32>,
    } else {
    }
    return
  }
  func.func @transform_0(%arg0: i32, %arg1: i32) -> (i32, i32) {
    %c0_i32 = arith.constant 0 : i32
    %c0_i32_0 = arith.constant 0 : i32
    return %arg0, %c0_i32 : i32, i32
  }
  func.func @transform_1(%arg0: i32, %arg1: i32) -> (i32, i32) {
    %c0_i32 = arith.constant 0 : i32
    %c0_i32_0 = arith.constant 0 : i32
    return %c0_i32, %arg1 : i32, i32
  }
  func.func @transform_2(%arg0: i32, %arg1: i32) -> (i32, i32) {
    %c0_i32 = arith.constant 0 : i32
    %c0_i32_0 = arith.constant 0 : i32
    return %arg0, %c0_i32 : i32, i32
  }
  func.func @transform_3(%arg0: i32, %arg1: i32) -> (i32, i32) {
    %c0_i32 = arith.constant 0 : i32
    %c0_i32_0 = arith.constant 0 : i32
    return %c0_i32, %arg1 : i32, i32
  }
  func.func @transform_4(%arg0: i32, %arg1: i32) -> (i32, i32) {
    %c0_i32 = arith.constant 0 : i32
    %c0_i32_0 = arith.constant 0 : i32
    return %arg0, %c0_i32 : i32, i32
  }
  func.func @transform_5(%arg0: i32, %arg1: i32) -> (i32, i32) {
    %c0_i32 = arith.constant 0 : i32
    %c0_i32_0 = arith.constant 0 : i32
    return %arg0, %c0_i32 : i32, i32
  }
}

</mosaic_0001>

<llo_original>
// kernel: tpu_custom_call.1
$region0: #{tpu_custom_call.1}
  #allocation0 [shape = 'u32[]', space=smem, size = 0x4, offset = 0x4, fixed_abs, tag = 'smem constant byte address 0x4 - core index']
  #allocation1 [shape = 'u32[144,128]{1,0:T(1,128)}', space=vmem, size = 0x12000, scoped, tag = 'internal scratch']
  #allocation2 [shape = 'f32[8,1]{1,0:T(8,128)}', space=vmem, size = 0x1000, scoped, tag = 'scratch operand']
  #allocation3 [shape = 'f32[8,1]{1,0:T(8,128)}', space=vmem, size = 0x1000, scoped, tag = 'scratch operand']
  %s0 = inlined_call_operand.vmem [shape: bf16[8,32], index: 0, kind: input, shape index: {}]
  %s1 = inlined_call_operand.vmem [shape: bf16[32,8], index: 1, kind: input, shape index: {}]
  %s2 = inlined_call_operand.vmem [shape: s32[8,1], index: 2, kind: input, shape index: {}]
  %s3 = inlined_call_operand.vmem [shape: s32[1,8], index: 3, kind: input, shape index: {}]
  %s4 = inlined_call_operand.vmem [shape: f32[8,1], index: 4, kind: input, shape index: {}]
  %s5 = inlined_call_operand.vmem [shape: f32[8,1], index: 5, kind: output, shape index: {}]
  %s6 = sld [smem:[#allocation0]]
  $region46: #{tpu_custom_call.1} parent=0
    _
  %s8 = ssub.s32 1, %s6
  %s9 = scalar_select 0, %s8, %s6
  // Predicated region
  $region2: #{tpu_custom_call.1} parent=0 // pred_check
    _
  $region3: #{tpu_custom_call.1} parent=0 // pred_check_branch
    %11 = sbr.rel (0) target = $region5
  $region4: #{tpu_custom_call.1} parent=0 // pred_region
    _
  $region5: #{tpu_custom_call.1} parent=0 // pred_fallthru
    _
  // Predicated region
  $region6: #{tpu_custom_call.1} parent=0 // pred_check
    _
  $region7: #{tpu_custom_call.1} parent=0 // pred_check_branch
    %13 = sbr.rel (0) target = $region9
  $region8: #{tpu_custom_call.1} parent=0 // pred_region
    _
  $region9: #{tpu_custom_call.1} parent=0 // pred_fallthru
    _
  // Predicated region
  $region10: #{tpu_custom_call.1} parent=0 // pred_check
    _
  $region11: #{tpu_custom_call.1} parent=0 // pred_check_branch
    %15 = sbr.rel (0) target = $region13
  $region12: #{tpu_custom_call.1} parent=0 // pred_region
    _
  $region13: #{tpu_custom_call.1} parent=0 // pred_fallthru
    _
  // Predicated region
  $region14: #{tpu_custom_call.1} parent=0 // pred_check
    _
  $region15: #{tpu_custom_call.1} parent=0 // pred_check_branch
    %17 = sbr.rel (0) target = $region17
  $region16: #{tpu_custom_call.1} parent=0 // pred_region
    _
  $region17: #{tpu_custom_call.1} parent=0 // pred_fallthru
    _
  // Predicated region
  $region18: #{tpu_custom_call.1} parent=0 // pred_check
    _
  $region19: #{tpu_custom_call.1} parent=0 // pred_check_branch
    %19 = sbr.rel (0) target = $region21
  $region20: #{tpu_custom_call.1} parent=0 // pred_region
    _
  $region21: #{tpu_custom_call.1} parent=0 // pred_fallthru
    _
  %p21 = scmp.eq.s32.totalorder 0, 0
  // Predicated region
  $region22: #{tpu_custom_call.1} parent=0 // pred_check
    %p22 = pneg %p21
  $region23: #{tpu_custom_call.1} parent=0 // pred_check_branch
    %24 = sbr.rel (%p22) target = $region25
  $region24: #{tpu_custom_call.1} parent=0 // pred_region
    %vm25 = vcmask 7168
    %26 = vst.msk [vmem:[#allocation2] sm:$0xff] %vm25, 0.0
    %27 = vst.msk [vmem:[#allocation3] sm:$0xff] %vm25, 0.0
  $region25: #{tpu_custom_call.1} parent=0 // pred_fallthru
    _
  %v28 = vld [vmem:[%s0] sm:$0xf]
  %v29 = vld [vmem:[%s1] sm:$0xf]
  %v30 = vld [vmem:[%s1 + $0x4] sm:$0xf]
  %v31 = vld [vmem:[%s1 + $0x8] sm:$0xf]
  %v32 = vld [vmem:[%s1 + $0xc] sm:$0xf]
  %v37 = vunpack.c.l.b16 %v29
  %v38 = vunpack.c.l.b16 %v30
  %v39 = vunpack.c.l.b16 %v31
  %v40 = vunpack.c.l.b16 %v32
  %v41 = vpack.c.b16 %v38, %v37
  %v42 = vpack.c.b16 %v40, %v39
  %vm45 = vcmask 261120
  %v47 = vsel %vm45, %v28, 0
  %49 = vmatprep.subr.bf16.mxu0 0
  %50 = vmatpush1.bf16.msra.mxu0 %v41
  %51 = vmatprep.subr.bf16.mxu0 0
  %52 = vmatpush1.bf16.msra.mxu0 %v42
  %53 = vmatprep.subr.bf16.mxu0 0
  %54 = vmatpush1.bf16.msra.mxu0 0
  %55 = vmatprep.subr.bf16.mxu0 0
  %56 = vmatpush1.bf16.msra.mxu0 0
  %57 = vmatprep.subr.bf16.mxu0 0
  %58 = vmatpush1.bf16.msra.mxu0 0
  %59 = vmatprep.subr.bf16.mxu0 0
  %60 = vmatpush1.bf16.msra.mxu0 0
  %61 = vmatprep.subr.bf16.mxu0 0
  %62 = vmatpush1.bf16.msra.mxu0 0
  %63 = vmatprep.subr.bf16.mxu0 0
  %64 = vmatpush1.bf16.msra.mxu0 0
  %65 = vmatprep.subr.bf16.mxu0 0
  %66 = vmatpush1.bf16.msra.mxu0 0
  %67 = vmatprep.subr.bf16.mxu0 0
  %68 = vmatpush1.bf16.msra.mxu0 0
  %69 = vmatprep.subr.bf16.mxu0 0
  %70 = vmatpush1.bf16.msra.mxu0 0
  %71 = vmatprep.subr.bf16.mxu0 0
  %72 = vmatpush1.bf16.msra.mxu0 0
  %73 = vmatprep.subr.bf16.mxu0 0
  %74 = vmatpush1.bf16.msra.mxu0 0
  %75 = vmatprep.subr.bf16.mxu0 0
  %76 = vmatpush1.bf16.msra.mxu0 0
  %77 = vmatprep.subr.bf16.mxu0 0
  %78 = vmatpush1.bf16.msra.mxu0 0
  %79 = vmatprep.subr.bf16.mxu0 0
  %80 = vmatpush1.bf16.msra.mxu0 0
  %81 = vmatprep.mubr.bf16.mxu0 0
  %82 = vmatmul.mubr.bf16.gmra.mrb[0].mxu0 %v47
  %v83 = vpop.f32.mrb[0].mxu0
  %v84 = vadd.f32 0.0, %v83
  %v85 = vpop.f32.mrb[0].mxu0
  %v86 = vpop.f32.mrb[0].mxu0
  %v87 = vpop.f32.mrb[0].mxu0
  %88 = vdwg.mxu0
  %v89 = vld [vmem:[%s2] sm:$0xff]
  %v90 = vld [vmem:[%s3] sm:$0x1]
  %91 = vset.pattern.permute.xlu0 0
  %92 = vperm.xlu0 %91, %v89
  %v93 = vpop.permute.xlu0 %92
  %v94 = vlaneseq
  %v95 = vshrl.u32 %v94, 7
  %v96 = vsub.s32 0, %v95
  %v97 = vrot.slane %v90, %v96
  %vm98 = vcmp.eq.s32.totalorder %v93, %v97
  %v99 = vmul.f32 %v84, 1.442695
  %v100 = vpow.pop %v99
  %p101 = scmp.ne.s32.totalorder 0, 0
  // Predicated region
  $region26: #{tpu_custom_call.1} parent=0 // pred_check
    %p102 = pneg %p101
  $region27: #{tpu_custom_call.1} parent=0 // pred_check_branch
    %104 = sbr.rel (%p102) target = $region29
  $region28: #{tpu_custom_call.1} parent=0 // pred_region
    %v105 = vld [vmem:[#allocation2] sm:$0xff]
    %v106 = vsel %vm98, %v84, 0.0
    %vm107 = vcmask 64512
    %v108 = vsel %vm107, %v106, 0.0
    %109 = vadd.xlane.f32.xlu0 %v108
    %v110 = vpop.xlane.xlu0 %109
    %v111 = vadd.f32 %v105, %v110
    %vm112 = vcmask 7168
    %113 = vst.msk [vmem:[#allocation2] sm:$0xff] %vm112, %v111
    %v114 = vld [vmem:[#allocation3] sm:$0xff]
    %v115 = vsel %vm107, %v100, 0.0
    %116 = vadd.xlane.f32.xlu0 %v115
    %v117 = vpop.xlane.xlu0 %116
    %v118 = vadd.f32 %v114, %v117
    %119 = vst.msk [vmem:[#allocation3] sm:$0xff] %vm112, %v118
  $region29: #{tpu_custom_call.1} parent=0 // pred_fallthru
    _
  %p120 = scmp.eq.s32.totalorder 0, 0
  // Predicated region
  $region30: #{tpu_custom_call.1} parent=0 // pred_check
    %p121 = pneg %p120
  $region31: #{tpu_custom_call.1} parent=0 // pred_check_branch
    %123 = sbr.rel (%p121) target = $region33
  $region32: #{tpu_custom_call.1} parent=0 // pred_region
    %v124 = vlaneseq
    %v125 = vshrl.u32 %v124, 7
    %v126 = vlaneseq
    %v127 = vand.u32 %v126, 127
    %vm128 = vcmp.ne.s32.totalorder %v125, %v127
    %v129 = vld [vmem:[#allocation2] sm:$0xff]
    %vm130 = vmand %vm98, %vm128
    %v131 = vsel %vm130, %v84, 0.0
    %vm132 = vcmask 64512
    %v133 = vsel %vm132, %v131, 0.0
    %134 = vadd.xlane.f32.xlu0 %v133
    %v135 = vpop.xlane.xlu0 %134
    %v136 = vadd.f32 %v129, %v135
    %vm137 = vcmask 7168
    %138 = vst.msk [vmem:[#allocation2] sm:$0xff] %vm137, %v136
    %v139 = vld [vmem:[#allocation3] sm:$0xff]
    %v140 = vsel %vm128, %v100, 0.0
    %v141 = vsel %vm132, %v140, 0.0
    %142 = vadd.xlane.f32.xlu0 %v141
    %v143 = vpop.xlane.xlu0 %142
    %v144 = vadd.f32 %v139, %v143
    %145 = vst.msk [vmem:[#allocation3] sm:$0xff] %vm137, %v144
  $region33: #{tpu_custom_call.1} parent=0 // pred_fallthru
    _
  // Predicated region
  $region34: #{tpu_custom_call.1} parent=0 // pred_check
    %p146 = pneg %p21
  $region35: #{tpu_custom_call.1} parent=0 // pred_check_branch
    %148 = sbr.rel (%p146) target = $region37
  $region36: #{tpu_custom_call.1} parent=0 // pred_region
    %v149 = vld [vmem:[%s4] sm:$0xff]
    %vm150 = vcmp.gt.f32.partialorder %v149, 0.5
    %v151 = vld [vmem:[#allocation2] sm:$0xff]
    %v152 = vmax.f32 %v149, 1.0
    %v153 = vrcp.pop %v152
    %v154 = vmul.f32 %v151, %v153
    %v155 = vld [vmem:[#allocation3] sm:$0xff]
    %v156 = vlog2.pop %v155
    %v157 = vmul.f32 %v156, 0.6931472
    %v158 = vsub.f32 %v154, %v157
    %v159 = vmul.f32 %v158, 1.442695
    %v160 = vpow.pop %v159
    %v161 = vadd.f32 %v160, 1e-10
    %v162 = vlog2.pop %v161
    %v163 = vmul.f32 %v162, 0.6931472
    %v164 = vsub.f32 0.0, %v163
    %v165 = vsel %vm150, %v164, 0.0
    %vm166 = vcmask 7168
    %167 = vst.msk [vmem:[%s5] sm:$0xff] %vm166, %v165
  $region37: #{tpu_custom_call.1} parent=0 // pred_fallthru
    _
  // Predicated region
  $region38: #{tpu_custom_call.1} parent=0 // pred_check
    _
  $region39: #{tpu_custom_call.1} parent=0 // pred_check_branch
    %169 = sbr.rel (0) target = $region41
  $region40: #{tpu_custom_call.1} parent=0 // pred_region
    _
  $region41: #{tpu_custom_call.1} parent=0 // pred_fallthru
    _
  // Predicated region
  $region42: #{tpu_custom_call.1} parent=0 // pred_check
    _
  $region43: #{tpu_custom_call.1} parent=0 // pred_check_branch
    %171 = sbr.rel (0) target = $region45
  $region44: #{tpu_custom_call.1} parent=0 // pred_region
    _
  $region45: #{tpu_custom_call.1} parent=0 // pred_fallthru
    _

</llo_original>
